<compile_context>
chip_gen: v7x
topology: tpu7x:2x2x1
jax: 0.10.0
libtpu: 0.0.40
codegen_flags: <defaults>
</compile_context>

<pallas_src>
import functools

import jax
import jax.numpy as jnp
from jax import lax
from jax.experimental import pallas as pl
from jax.experimental.pallas import tpu as pltpu


_INV_SQRT2 = 0.7071067811865476


def _gelu_exact(x):
    # Exact GELU as used by torch.nn.GELU() (approximate='none').
    return 0.5 * x * (1.0 + lax.erf(x * _INV_SQRT2))


def _round_up(x, m):
    return ((x + m - 1) // m) * m


def _sublane_multiple(dtype):
    # Rows per sublane group: 8 for 32-bit, 16 for bf16/f16, 32 for 8-bit dtypes.
    return max(8, 32 // jnp.dtype(dtype).itemsize)


def _vmem_capacity_bytes():
    try:
        return int(pltpu.get_tpu_info().vmem_capacity_bytes)
    except Exception:
        return 64 << 20  # conservative fallback (v7x per-TC VMEM)


# --------------------------------------------------------------------------- kernels


def _mlp_resident_kernel(x_ref, w1_ref, b1_ref, w2_ref, b2_ref, o_ref):
    # Whole hidden dim resident: (tm,Cin)@(Cin,Chid) -> +b1 -> GELU ->
    # (tm,Chid)@(Chid,Cout) -> +b2 -> GELU.  f32 accumulate via preferred_element_type;
    # MXU sees operands in their stored dtype.
    h = jnp.dot(x_ref[...], w1_ref[...], preferred_element_type=jnp.float32)
    h = _gelu_exact(h + b1_ref[...].astype(jnp.float32))
    y = jnp.dot(h.astype(w2_ref.dtype), w2_ref[...],
                preferred_element_type=jnp.float32)
    y = _gelu_exact(y + b2_ref[...].astype(jnp.float32))
    # drop=0.0 -> Dropout is identity (applied after each activation in the reference).
    o_ref[...] = y.astype(o_ref.dtype)


def _mlp_split_kernel(x_ref, w1_ref, b1_ref, w2_ref, b2_ref, o_ref, acc_ref):
    # Hidden dim split across grid axis 1 ("arbitrary"): per k-step compute the
    # fc1+GELU slab for this hidden block and accumulate its fc2 contribution into
    # an f32 VMEM accumulator; finalize (bias2 + GELU + cast) on the last step.
    k = pl.program_id(1)

    @pl.when(k == 0)
    def _():
        acc_ref[...] = jnp.zeros_like(acc_ref)

    h = jnp.dot(x_ref[...], w1_ref[...], preferred_element_type=jnp.float32)
    h = _gelu_exact(h + b1_ref[...].astype(jnp.float32))
    acc_ref[...] += jnp.dot(h.astype(w2_ref.dtype), w2_ref[...],
                            preferred_element_type=jnp.float32)

    @pl.when(k == pl.num_programs(1) - 1)
    def _():
        y = _gelu_exact(acc_ref[...] + b2_ref[...].astype(jnp.float32))
        o_ref[...] = y.astype(o_ref.dtype)


# --------------------------------------------------------------------------- wrapper


@functools.partial(jax.jit, static_argnames=("tile_m", "tile_k", "force_split"))
def mlp_pallas(x, w1, b1, w2, b2, *, tile_m=256, tile_k=512, force_split=False):
    """x: (B, N, in_features). Weights stored transposed vs PyTorch: W: (in, out).

    Returns (B, N, out_features).
    """
    B, N, Cin = x.shape
    Chid = w1.shape[1]
    Cout = w2.shape[1]
    M = B * N

    x_isz = jnp.dtype(x.dtype).itemsize
    w_isz = jnp.dtype(w1.dtype).itemsize
    o_isz = x_isz

    # --- Lane/sublane-aligned shapes. ---
    row_align = _sublane_multiple(x.dtype)
    Cin_p = _round_up(Cin, 128)
    Cout_p = _round_up(Cout, 128)

    M_p = _round_up(M, row_align)
    tm = min(_round_up(tile_m, row_align), M_p)
    M_p = _round_up(M_p, tm)              # every row tile is full (no masked stores)

    vmem_cap = _vmem_capacity_bytes()
    headroom = 4 << 20

    # --- Path selection: can W1/W2 (+ pipelined tiles + f32 intermediates) stay
    #     resident on one TensorCore?  (On v7x each TC holds its own copy.) ---
    Chid_r = _round_up(Chid, 128)
    resident_budget = (
        (Cin_p * Chid_r + Chid_r * Cout_p + Chid_r + Cout_p) * w_isz   # 1x weights/biases
        + 2 * tm * Cin_p * x_isz + 2 * tm * Cout_p * o_isz             # 2x x / out row tiles
        + tm * Chid_r * (4 + w_isz)                                    # f32 h + cast copy
        + tm * Cout_p * 4                                              # f32 y
    )
    use_split = force_split or (resident_budget + headroom > int(0.8 * vmem_cap))

    if use_split:
        nk = max(1, -(-Chid // tile_k))
        tk = _round_up(-(-Chid // nk), 128)
        Chid_p = nk * tk
    else:
        Chid_p = Chid_r

    # --- Conditional padding (skipped when already aligned; padded hidden/out cols
    #     are exact zeros since GELU(0)=0 and padded weight rows/cols are 0). ---
    x2d = x.reshape(M, Cin)
    if M_p != M or Cin_p != Cin:
        x2d = jnp.pad(x2d, ((0, M_p - M), (0, Cin_p - Cin)))
    w1p = w1 if (Cin_p == Cin and Chid_p == Chid) else jnp.pad(
        w1, ((0, Cin_p - Cin), (0, Chid_p - Chid)))
    b1p = (b1 if Chid_p == Chid else jnp.pad(b1, (0, Chid_p - Chid))).reshape(1, Chid_p)
    w2p = w2 if (Chid_p == Chid and Cout_p == Cout) else jnp.pad(
        w2, ((0, Chid_p - Chid), (0, Cout_p - Cout)))
    b2p = (b2 if Cout_p == Cout else jnp.pad(b2, (0, Cout_p - Cout))).reshape(1, Cout_p)

    # --- Grid / specs / budget per path. ---
    if use_split:
        tk_ = tk
        grid = (M_p // tm, Chid_p // tk_)
        in_specs = [
            pl.BlockSpec((tm, Cin_p), lambda i, k: (i, 0)),
            pl.BlockSpec((Cin_p, tk_), lambda i, k: (0, k)),
            pl.BlockSpec((1, tk_), lambda i, k: (0, k)),
            pl.BlockSpec((tk_, Cout_p), lambda i, k: (k, 0)),
            pl.BlockSpec((1, Cout_p), lambda i, k: (0, 0),
                         pipeline_mode=pl.Buffered(1)),
        ]
        out_spec = pl.BlockSpec((tm, Cout_p), lambda i, k: (i, 0))
        scratch = [pltpu.VMEM((tm, Cout_p), jnp.float32)]
        kernel = _mlp_split_kernel
        dims = ("parallel", "arbitrary")
        budget = (
            2 * tm * Cin_p * x_isz + 2 * tm * Cout_p * o_isz          # x / out tiles
            + 2 * (Cin_p * tk_ + tk_ * Cout_p + tk_) * w_isz          # W1/W2/b1 k-slices
            + Cout_p * w_isz                                          # b2 (single-buffered)
            + tm * Cout_p * 4                                         # f32 accumulator
            + tm * tk_ * (4 + w_isz)                                  # f32 h + cast copy
        )
    else:
        grid = (M_p // tm,)
        in_specs = [
            pl.BlockSpec((tm, Cin_p), lambda i: (i, 0)),
            # Grid-invariant weights/biases: single-buffered (no dead VMEM copy).
            pl.BlockSpec((Cin_p, Chid_p), lambda i: (0, 0),
                         pipeline_mode=pl.Buffered(1)),
            pl.BlockSpec((1, Chid_p), lambda i: (0, 0),
                         pipeline_mode=pl.Buffered(1)),
            pl.BlockSpec((Chid_p, Cout_p), lambda i: (0, 0),
                         pipeline_mode=pl.Buffered(1)),
            pl.BlockSpec((1, Cout_p), lambda i: (0, 0),
                         pipeline_mode=pl.Buffered(1)),
        ]
        out_spec = pl.BlockSpec((tm, Cout_p), lambda i: (i, 0))
        scratch = []
        kernel = _mlp_resident_kernel
        dims = ("parallel",)
        budget = resident_budget

    vmem_limit = int(min(max(budget + headroom, 24 << 20), int(0.85 * vmem_cap)))

    cost = pl.CostEstimate(
        flops=2 * M_p * Cin_p * Chid_p + 2 * M_p * Chid_p * Cout_p,
        transcendentals=M_p * (Chid_p + Cout_p),
        bytes_accessed=(
            M_p * Cin_p * x_isz                                   # x read
            + (Cin_p * Chid_p + Chid_p * Cout_p) * w_isz          # weights read once
            + (Chid_p + Cout_p) * w_isz                           # biases
            + M_p * Cout_p * o_isz                                # output write
        ),
    )

    out2d = pl.pallas_call(
        kernel,
        out_shape=jax.ShapeDtypeStruct((M_p, Cout_p), x.dtype),
        grid_spec=pltpu.PrefetchScalarGridSpec(
            num_scalar_prefetch=0,
            grid=grid,
            in_specs=in_specs,
            out_specs=out_spec,
            scratch_shapes=scratch,
        ),
        compiler_params=pltpu.CompilerParams(
            dimension_semantics=dims,
            vmem_limit_bytes=vmem_limit,
        ),
        cost_estimate=cost,
    )(x2d, w1p, b1p, w2p, b2p)

    return out2d[:M, :Cout].reshape(B, N, Cout)


# --------------------------------------------------------------------------- helpers


def init_params(key, in_features, hidden_features, out_features, dtype=jnp.float32):
    # Deterministic init matching nn.Linear's shapes (stored transposed: (in, out)).
    k1, k2, k3, k4 = jax.random.split(key, 4)
    lim1 = 1.0 / (in_features ** 0.5)
    lim2 = 1.0 / (hidden_features ** 0.5)
    w1 = jax.random.uniform(k1, (in_features, hidden_features), dtype, -lim1, lim1)
    b1 = jax.random.uniform(k2, (hidden_features,), dtype, -lim1, lim1)
    w2 = jax.random.uniform(k3, (hidden_features, out_features), dtype, -lim2, lim2)
    b2 = jax.random.uniform(k4, (out_features,), dtype, -lim2, lim2)
    return w1, b1, w2, b2


def mlp_reference(x, w1, b1, w2, b2):
    h = _gelu_exact(jnp.einsum("bnc,ch->bnh", x, w1) + b1)
    y = _gelu_exact(jnp.einsum("bnh,ho->bno", h, w2) + b2)
    return y


if __name__ == "__main__":
    B, N = 2, 8
    in_features, hidden_features, out_features = 32, 64, 32

    key = jax.random.PRNGKey(0)
    kx, kp = jax.random.split(key)
    x = jax.random.normal(kx, (B, N, in_features), dtype=jnp.float32)
    w1, b1, w2, b2 = init_params(kp, in_features, hidden_features, out_features)

    ref = mlp_reference(x, w1, b1, w2, b2)

    # Resident-weights path (default at these sizes).
    out = jax.block_until_ready(mlp_pallas(x, w1, b1, w2, b2))
    assert out.shape == (B, N, out_features)
    assert jnp.allclose(out, ref, atol=1e-5, rtol=1e-5), "resident path mismatch"

    # Hidden-dim split path (what large models / v7x use); forced here with a tiny
    # tile_k so the reduction actually runs over >1 grid step.
    out_s = jax.block_until_ready(
        mlp_pallas(x, w1, b1, w2, b2, tile_k=32, force_split=True))
    assert out_s.shape == (B, N, out_features)
    assert jnp.allclose(out_s, ref, atol=1e-5, rtol=1e-5), "split path mismatch"

    print("KERNEL_OK")
</pallas_src>

<mosaic_0001>
module attributes {stable_mosaic.version = 11 : i64} {
  func.func @_mlp_resident_kernel(%arg0: i32, %arg1: memref<16x128xf32, #tpu.memory_space<vmem>>, %arg2: memref<128x128xf32, #tpu.memory_space<vmem>>, %arg3: memref<1x128xf32, #tpu.memory_space<vmem>>, %arg4: memref<128x128xf32, #tpu.memory_space<vmem>>, %arg5: memref<1x128xf32, #tpu.memory_space<vmem>>, %arg6: memref<16x128xf32, #tpu.memory_space<vmem>>) attributes {dimension_semantics = [#tpu.dimension_semantics<parallel>], iteration_bounds = array<i64: 1>, scalar_prefetch = 0 : i64, scratch_operands = 0 : i64, tpu.core_type = #tpu.core_type<tc>, window_params = [{transform_indices = @transform_0, window_bounds = array<i64: 16, 128>}, {pipeline_mode = #tpu.pipeline_mode<synchronous>, transform_indices = @transform_1, window_bounds = array<i64: 128, 128>}, {pipeline_mode = #tpu.pipeline_mode<synchronous>, transform_indices = @transform_2, window_bounds = array<i64: 1, 128>}, {pipeline_mode = #tpu.pipeline_mode<synchronous>, transform_indices = @transform_3, window_bounds = array<i64: 128, 128>}, {pipeline_mode = #tpu.pipeline_mode<synchronous>, transform_indices = @transform_4, window_bounds = array<i64: 1, 128>}, {transform_indices = @transform_5, window_bounds = array<i64: 16, 128>}]} {
    %c0 = arith.constant 0 : index
    %c0_0 = arith.constant 0 : index
    %0 = vector.load %arg1[%c0, %c0_0] : memref<16x128xf32, #tpu.memory_space<vmem>>, vector<16x128xf32>
    %c0_1 = arith.constant 0 : index
    %c0_2 = arith.constant 0 : index
    %1 = vector.load %arg2[%c0_1, %c0_2] : memref<128x128xf32, #tpu.memory_space<vmem>>, vector<128x128xf32>
    %cst = arith.constant dense<0.000000e+00> : vector<16x128xf32>
    %2 = tpu.matmul %0, %1, %cst {dimension_numbers = #tpu.dot_dimension_numbers<[1], [0], [0], [1], [0, 0, 1, 1], [], []>} : vector<16x128xf32>, vector<128x128xf32>, vector<16x128xf32> -> vector<16x128xf32>
    %c0_3 = arith.constant 0 : index
    %c0_4 = arith.constant 0 : index
    %3 = vector.load %arg3[%c0_3, %c0_4] : memref<1x128xf32, #tpu.memory_space<vmem>>, vector<1x128xf32>
    %4 = vector.broadcast %3 : vector<1x128xf32> to vector<16x128xf32>
    %5 = arith.addf %2, %4 : vector<16x128xf32>
    %cst_5 = arith.constant 5.000000e-01 : f32
    %6 = vector.broadcast %cst_5 : f32 to vector<16x128xf32>
    %7 = arith.mulf %6, %5 : vector<16x128xf32>
    %cst_6 = arith.constant 0.707106769 : f32
    %8 = vector.broadcast %cst_6 : f32 to vector<16x128xf32>
    %9 = arith.mulf %5, %8 : vector<16x128xf32>
    %10 = math.erf %9 : vector<16x128xf32>
    %cst_7 = arith.constant 1.000000e+00 : f32
    %11 = vector.broadcast %cst_7 : f32 to vector<16x128xf32>
    %12 = arith.addf %11, %10 : vector<16x128xf32>
    %13 = arith.mulf %7, %12 : vector<16x128xf32>
    %c0_8 = arith.constant 0 : index
    %c0_9 = arith.constant 0 : index
    %14 = vector.load %arg4[%c0_8, %c0_9] : memref<128x128xf32, #tpu.memory_space<vmem>>, vector<128x128xf32>
    %cst_10 = arith.constant dense<0.000000e+00> : vector<16x128xf32>
    %15 = tpu.matmul %13, %14, %cst_10 {dimension_numbers = #tpu.dot_dimension_numbers<[1], [0], [0], [1], [0, 0, 1, 1], [], []>} : vector<16x128xf32>, vector<128x128xf32>, vector<16x128xf32> -> vector<16x128xf32>
    %c0_11 = arith.constant 0 : index
    %c0_12 = arith.constant 0 : index
    %16 = vector.load %arg5[%c0_11, %c0_12] : memref<1x128xf32, #tpu.memory_space<vmem>>, vector<1x128xf32>
    %17 = vector.broadcast %16 : vector<1x128xf32> to vector<16x128xf32>
    %18 = arith.addf %15, %17 : vector<16x128xf32>
    %cst_13 = arith.constant 5.000000e-01 : f32
    %19 = vector.broadcast %cst_13 : f32 to vector<16x128xf32>
    %20 = arith.mulf %19, %18 : vector<16x128xf32>
    %cst_14 = arith.constant 0.707106769 : f32
    %21 = vector.broadcast %cst_14 : f32 to vector<16x128xf32>
    %22 = arith.mulf %18, %21 : vector<16x128xf32>
    %23 = math.erf %22 : vector<16x128xf32>
    %cst_15 = arith.constant 1.000000e+00 : f32
    %24 = vector.broadcast %cst_15 : f32 to vector<16x128xf32>
    %25 = arith.addf %24, %23 : vector<16x128xf32>
    %26 = arith.mulf %20, %25 : vector<16x128xf32>
    %c0_16 = arith.constant 0 : index
    %c0_17 = arith.constant 0 : index
    %27 = vector.load %arg6[%c0_16, %c0_17] : memref<16x128xf32, #tpu.memory_space<vmem>>, vector<16x128xf32>
    tpu.vector_store %arg6[%c0_16, %c0_17], %26 {strides = array<i32>} : memref<16x128xf32, #tpu.memory_space<vmem>>, vector<16x128xf32>,
    return
  }
  func.func @transform_0(%arg0: i32) -> (i32, i32) {
    %c0_i32 = arith.constant 0 : i32
    %c0_i32_0 = arith.constant 0 : i32
    return %arg0, %c0_i32 : i32, i32
  }
  func.func @transform_1(%arg0: i32) -> (i32, i32) {
    %c0_i32 = arith.constant 0 : i32
    %c0_i32_0 = arith.constant 0 : i32
    %c0_i32_1 = arith.constant 0 : i32
    return %c0_i32, %c0_i32_0 : i32, i32
  }
  func.func @transform_2(%arg0: i32) -> (i32, i32) {
    %c0_i32 = arith.constant 0 : i32
    %c0_i32_0 = arith.constant 0 : i32
    %c0_i32_1 = arith.constant 0 : i32
    return %c0_i32, %c0_i32_0 : i32, i32
  }
  func.func @transform_3(%arg0: i32) -> (i32, i32) {
    %c0_i32 = arith.constant 0 : i32
    %c0_i32_0 = arith.constant 0 : i32
    %c0_i32_1 = arith.constant 0 : i32
    return %c0_i32, %c0_i32_0 : i32, i32
  }
  func.func @transform_4(%arg0: i32) -> (i32, i32) {
    %c0_i32 = arith.constant 0 : i32
    %c0_i32_0 = arith.constant 0 : i32
    %c0_i32_1 = arith.constant 0 : i32
    return %c0_i32, %c0_i32_0 : i32, i32
  }
  func.func @transform_5(%arg0: i32) -> (i32, i32) {
    %c0_i32 = arith.constant 0 : i32
    %c0_i32_0 = arith.constant 0 : i32
    return %arg0, %c0_i32 : i32, i32
  }
}

</mosaic_0001>

<llo_original>
// kernel: mlp_pallas.1
$region0: #{mlp_pallas.1}
  #allocation0 [shape = 'u32[]', space=smem, size = 0x4, offset = 0x4, fixed_abs, tag = 'smem constant byte address 0x4 - core index']
  #allocation1 [shape = 'u32[144,128]{1,0:T(1,128)}', space=vmem, size = 0x12000, scoped, tag = 'internal scratch']
  %s0 = inlined_call_operand.vmem [shape: f32[16,128], index: 0, kind: input, shape index: {}]
  %s1 = inlined_call_operand.vmem [shape: f32[128,128], index: 1, kind: input, shape index: {}]
  %s2 = inlined_call_operand.vmem [shape: f32[1,128], index: 2, kind: input, shape index: {}]
  %s3 = inlined_call_operand.vmem [shape: f32[128,128], index: 3, kind: input, shape index: {}]
  %s4 = inlined_call_operand.vmem [shape: f32[1,128], index: 4, kind: input, shape index: {}]
  %s5 = inlined_call_operand.vmem [shape: f32[16,128], index: 5, kind: output, shape index: {}]
  %s6 = sld [smem:[#allocation0]]
  $region30: #{mlp_pallas.1} parent=0
    _
  %s8 = ssub.s32 1, %s6
  %s9 = scalar_select 0, %s8, %s6
  // Predicated region
  $region2: #{mlp_pallas.1} parent=0 // pred_check
    _
  $region3: #{mlp_pallas.1} parent=0 // pred_check_branch
    %11 = sbr.rel (0) target = $region5
  $region4: #{mlp_pallas.1} parent=0 // pred_region
    _
  $region5: #{mlp_pallas.1} parent=0 // pred_fallthru
    _
  // Predicated region
  $region6: #{mlp_pallas.1} parent=0 // pred_check
    _
  $region7: #{mlp_pallas.1} parent=0 // pred_check_branch
    %13 = sbr.rel (0) target = $region9
  $region8: #{mlp_pallas.1} parent=0 // pred_region
    _
  $region9: #{mlp_pallas.1} parent=0 // pred_fallthru
    _
  // Predicated region
  $region10: #{mlp_pallas.1} parent=0 // pred_check
    _
  $region11: #{mlp_pallas.1} parent=0 // pred_check_branch
    %15 = sbr.rel (0) target = $region13
  $region12: #{mlp_pallas.1} parent=0 // pred_region
    _
  $region13: #{mlp_pallas.1} parent=0 // pred_fallthru
    _
  // Predicated region
  $region14: #{mlp_pallas.1} parent=0 // pred_check
    _
  $region15: #{mlp_pallas.1} parent=0 // pred_check_branch
    %17 = sbr.rel (0) target = $region17
  $region16: #{mlp_pallas.1} parent=0 // pred_region
    _
  $region17: #{mlp_pallas.1} parent=0 // pred_fallthru
    _
  // Predicated region
  $region18: #{mlp_pallas.1} parent=0 // pred_check
    _
  $region19: #{mlp_pallas.1} parent=0 // pred_check_branch
    %19 = sbr.rel (0) target = $region21
  $region20: #{mlp_pallas.1} parent=0 // pred_region
    _
  $region21: #{mlp_pallas.1} parent=0 // pred_fallthru
    _
  %v20 = vld [vmem:[%s0] sm:$0xff]
  %v21 = vld [vmem:[%s0 + $0x8] sm:$0xff]
  %v22 = vld [vmem:[%s1] sm:$0xff]
  %v23 = vld [vmem:[%s1 + $0x8] sm:$0xff]
  %v24 = vld [vmem:[%s1 + $0x10] sm:$0xff]
  %v25 = vld [vmem:[%s1 + $0x18] sm:$0xff]
  %v26 = vld [vmem:[%s1 + $0x20] sm:$0xff]
  %v27 = vld [vmem:[%s1 + $0x28] sm:$0xff]
  %v28 = vld [vmem:[%s1 + $0x30] sm:$0xff]
  %v29 = vld [vmem:[%s1 + $0x38] sm:$0xff]
  %v30 = vld [vmem:[%s1 + $0x40] sm:$0xff]
  %v31 = vld [vmem:[%s1 + $0x48] sm:$0xff]
  %v32 = vld [vmem:[%s1 + $0x50] sm:$0xff]
  %v33 = vld [vmem:[%s1 + $0x58] sm:$0xff]
  %v34 = vld [vmem:[%s1 + $0x60] sm:$0xff]
  %v35 = vld [vmem:[%s1 + $0x68] sm:$0xff]
  %v36 = vld [vmem:[%s1 + $0x70] sm:$0xff]
  %v37 = vld [vmem:[%s1 + $0x78] sm:$0xff]
  %v38 = vld [vmem:[%s2] sm:$0x1]
  %v40 = vlaneseq
  %v41 = vshrl.u32 %v40, 7
  %v42 = vsub.s32 0, %v41
  %v43 = vrot.slane %v38, %v42
  %45 = vmatprep.subr.mxu0 0.0
  %46 = vmatpush1.msra.mxu0 %v22
  %47 = vmatprep.subr.mxu0 0.0
  %48 = vmatpush1.msra.mxu0 %v23
  %49 = vmatprep.subr.mxu0 0.0
  %50 = vmatpush1.msra.mxu0 %v24
  %51 = vmatprep.subr.mxu0 0.0
  %52 = vmatpush1.msra.mxu0 %v25
  %53 = vmatprep.subr.mxu0 0.0
  %54 = vmatpush1.msra.mxu0 %v26
  %55 = vmatprep.subr.mxu0 0.0
  %56 = vmatpush1.msra.mxu0 %v27
  %57 = vmatprep.subr.mxu0 0.0
  %58 = vmatpush1.msra.mxu0 %v28
  %59 = vmatprep.subr.mxu0 0.0
  %60 = vmatpush1.msra.mxu0 %v29
  %61 = vmatprep.subr.mxu0 0.0
  %62 = vmatpush1.msra.mxu0 %v30
  %63 = vmatprep.subr.mxu0 0.0
  %64 = vmatpush1.msra.mxu0 %v31
  %65 = vmatprep.subr.mxu0 0.0
  %66 = vmatpush1.msra.mxu0 %v32
  %67 = vmatprep.subr.mxu0 0.0
  %68 = vmatpush1.msra.mxu0 %v33
  %69 = vmatprep.subr.mxu0 0.0
  %70 = vmatpush1.msra.mxu0 %v34
  %71 = vmatprep.subr.mxu0 0.0
  %72 = vmatpush1.msra.mxu0 %v35
  %73 = vmatprep.subr.mxu0 0.0
  %74 = vmatpush1.msra.mxu0 %v36
  %75 = vmatprep.subr.mxu0 0.0
  %76 = vmatpush1.msra.mxu0 %v37
  %77 = vmatprep.subr.mxu0 0.0
  %78 = vmatpush1.msra.mxu0 0.0
  %79 = vmatprep.subr.mxu0 0.0
  %80 = vmatpush1.msra.mxu0 0.0
  %81 = vmatprep.subr.mxu0 0.0
  %82 = vmatpush1.msra.mxu0 0.0
  %83 = vmatprep.subr.mxu0 0.0
  %84 = vmatpush1.msra.mxu0 0.0
  %85 = vmatprep.subr.mxu0 0.0
  %86 = vmatpush1.msra.mxu0 0.0
  %87 = vmatprep.subr.mxu0 0.0
  %88 = vmatpush1.msra.mxu0 0.0
  %89 = vmatprep.subr.mxu0 0.0
  %90 = vmatpush1.msra.mxu0 0.0
  %91 = vmatprep.subr.mxu0 0.0
  %92 = vmatpush1.msra.mxu0 0.0
  %93 = vmatprep.subr.mxu0 0.0
  %94 = vmatpush1.msra.mxu0 0.0
  %95 = vmatprep.subr.mxu0 0.0
  %96 = vmatpush1.msra.mxu0 0.0
  %97 = vmatprep.subr.mxu0 0.0
  %98 = vmatpush1.msra.mxu0 0.0
  %99 = vmatprep.subr.mxu0 0.0
  %100 = vmatpush1.msra.mxu0 0.0
  %101 = vmatprep.subr.mxu0 0.0
  %102 = vmatpush1.msra.mxu0 0.0
  %103 = vmatprep.subr.mxu0 0.0
  %104 = vmatpush1.msra.mxu0 0.0
  %105 = vmatprep.subr.mxu0 0.0
  %106 = vmatpush1.msra.mxu0 0.0
  %107 = vmatprep.subr.mxu0 0.0
  %108 = vmatpush1.msra.mxu0 0.0
  %109 = vmatprep.mubr.f32.mxu0 0.0
  %110 = vmatmul.mubr.f32.gmra.mrb[0].mxu0 %v20
  %v111 = vpop.f32.mrb[0].mxu0
  %v112 = vadd.f32 %v43, %v111
  %v113 = vpop.f32.mrb[0].mxu0
  %114 = vmatprep.mubr.f32.mxu0 0.0
  %115 = vmatmul.mubr.f32.gmra.mrb[0].mxu0 %v21
  %v116 = vpop.f32.mrb[0].mxu0
  %v117 = vadd.f32 %v43, %v116
  %v118 = vpop.f32.mrb[0].mxu0
  %119 = vdwg.mxu0
  %v120 = vmul.f32 %v112, 0.5
  %v121 = vmul.f32 %v117, 0.5
  %v122 = vmul.f32 %v112, 0.70710677
  %v123 = vmul.f32 %v117, 0.70710677
  %v124 = verf.f32.pop %v122
  %v125 = verf.f32.pop %v123
  %v126 = vadd.f32 %v124, 1.0
  %v127 = vadd.f32 %v125, 1.0
  %v128 = vmul.f32 %v120, %v126
  %v129 = vmul.f32 %v121, %v127
  %v130 = vld [vmem:[%s3] sm:$0xff]
  %v131 = vld [vmem:[%s3 + $0x8] sm:$0xff]
  %v132 = vld [vmem:[%s3 + $0x10] sm:$0xff]
  %v133 = vld [vmem:[%s3 + $0x18] sm:$0xff]
  %v134 = vld [vmem:[%s3 + $0x20] sm:$0xff]
  %v135 = vld [vmem:[%s3 + $0x28] sm:$0xff]
  %v136 = vld [vmem:[%s3 + $0x30] sm:$0xff]
  %v137 = vld [vmem:[%s3 + $0x38] sm:$0xff]
  %v138 = vld [vmem:[%s3 + $0x40] sm:$0xff]
  %v139 = vld [vmem:[%s3 + $0x48] sm:$0xff]
  %v140 = vld [vmem:[%s3 + $0x50] sm:$0xff]
  %v141 = vld [vmem:[%s3 + $0x58] sm:$0xff]
  %v142 = vld [vmem:[%s3 + $0x60] sm:$0xff]
  %v143 = vld [vmem:[%s3 + $0x68] sm:$0xff]
  %v144 = vld [vmem:[%s3 + $0x70] sm:$0xff]
  %v145 = vld [vmem:[%s3 + $0x78] sm:$0xff]
  %v146 = vld [vmem:[%s4] sm:$0x1]
  %v148 = vlaneseq
  %v149 = vshrl.u32 %v148, 7
  %v150 = vsub.s32 0, %v149
  %v151 = vrot.slane %v146, %v150
  %153 = vmatprep.subr.mxu0 0.0
  %154 = vmatpush1.msra.mxu0 %v130
  %155 = vmatprep.subr.mxu0 0.0
  %156 = vmatpush1.msra.mxu0 %v131
  %157 = vmatprep.subr.mxu0 0.0
  %158 = vmatpush1.msra.mxu0 %v132
  %159 = vmatprep.subr.mxu0 0.0
  %160 = vmatpush1.msra.mxu0 %v133
  %161 = vmatprep.subr.mxu0 0.0
  %162 = vmatpush1.msra.mxu0 %v134
  %163 = vmatprep.subr.mxu0 0.0
  %164 = vmatpush1.msra.mxu0 %v135
  %165 = vmatprep.subr.mxu0 0.0
  %166 = vmatpush1.msra.mxu0 %v136
  %167 = vmatprep.subr.mxu0 0.0
  %168 = vmatpush1.msra.mxu0 %v137
  %169 = vmatprep.subr.mxu0 0.0
  %170 = vmatpush1.msra.mxu0 %v138
  %171 = vmatprep.subr.mxu0 0.0
  %172 = vmatpush1.msra.mxu0 %v139
  %173 = vmatprep.subr.mxu0 0.0
  %174 = vmatpush1.msra.mxu0 %v140
  %175 = vmatprep.subr.mxu0 0.0
  %176 = vmatpush1.msra.mxu0 %v141
  %177 = vmatprep.subr.mxu0 0.0
  %178 = vmatpush1.msra.mxu0 %v142
  %179 = vmatprep.subr.mxu0 0.0
  %180 = vmatpush1.msra.mxu0 %v143
  %181 = vmatprep.subr.mxu0 0.0
  %182 = vmatpush1.msra.mxu0 %v144
  %183 = vmatprep.subr.mxu0 0.0
  %184 = vmatpush1.msra.mxu0 %v145
  %185 = vmatprep.subr.mxu0 0.0
  %186 = vmatpush1.msra.mxu0 0.0
  %187 = vmatprep.subr.mxu0 0.0
  %188 = vmatpush1.msra.mxu0 0.0
  %189 = vmatprep.subr.mxu0 0.0
  %190 = vmatpush1.msra.mxu0 0.0
  %191 = vmatprep.subr.mxu0 0.0
  %192 = vmatpush1.msra.mxu0 0.0
  %193 = vmatprep.subr.mxu0 0.0
  %194 = vmatpush1.msra.mxu0 0.0
  %195 = vmatprep.subr.mxu0 0.0
  %196 = vmatpush1.msra.mxu0 0.0
  %197 = vmatprep.subr.mxu0 0.0
  %198 = vmatpush1.msra.mxu0 0.0
  %199 = vmatprep.subr.mxu0 0.0
  %200 = vmatpush1.msra.mxu0 0.0
  %201 = vmatprep.subr.mxu0 0.0
  %202 = vmatpush1.msra.mxu0 0.0
  %203 = vmatprep.subr.mxu0 0.0
  %204 = vmatpush1.msra.mxu0 0.0
  %205 = vmatprep.subr.mxu0 0.0
  %206 = vmatpush1.msra.mxu0 0.0
  %207 = vmatprep.subr.mxu0 0.0
  %208 = vmatpush1.msra.mxu0 0.0
  %209 = vmatprep.subr.mxu0 0.0
  %210 = vmatpush1.msra.mxu0 0.0
  %211 = vmatprep.subr.mxu0 0.0
  %212 = vmatpush1.msra.mxu0 0.0
  %213 = vmatprep.subr.mxu0 0.0
  %214 = vmatpush1.msra.mxu0 0.0
  %215 = vmatprep.subr.mxu0 0.0
  %216 = vmatpush1.msra.mxu0 0.0
  %217 = vmatprep.mubr.f32.mxu0 0.0
  %218 = vmatmul.mubr.f32.gmra.mrb[0].mxu0 %v128
  %v219 = vpop.f32.mrb[0].mxu0
  %v220 = vadd.f32 %v151, %v219
  %v221 = vpop.f32.mrb[0].mxu0
  %222 = vmatprep.mubr.f32.mxu0 0.0
  %223 = vmatmul.mubr.f32.gmra.mrb[0].mxu0 %v129
  %v224 = vpop.f32.mrb[0].mxu0
  %v225 = vadd.f32 %v151, %v224
  %v226 = vpop.f32.mrb[0].mxu0
  %227 = vdwg.mxu0
  %v228 = vmul.f32 %v220, 0.5
  %v229 = vmul.f32 %v225, 0.5
  %v230 = vmul.f32 %v220, 0.70710677
  %v231 = vmul.f32 %v225, 0.70710677
  %v232 = verf.f32.pop %v230
  %v233 = verf.f32.pop %v231
  %v234 = vadd.f32 %v232, 1.0
  %v235 = vadd.f32 %v233, 1.0
  %v236 = vmul.f32 %v228, %v234
  %v237 = vmul.f32 %v229, %v235
  %238 = vst [vmem:[%s5] sm:$0xff] %v236
  %239 = vst [vmem:[%s5 + $0x8] sm:$0xff] %v237
  // Predicated region
  $region22: #{mlp_pallas.1} parent=0 // pred_check
    _
  $region23: #{mlp_pallas.1} parent=0 // pred_check_branch
    %241 = sbr.rel (0) target = $region25
  $region24: #{mlp_pallas.1} parent=0 // pred_region
    _
  $region25: #{mlp_pallas.1} parent=0 // pred_fallthru
    _
  // Predicated region
  $region26: #{mlp_pallas.1} parent=0 // pred_check
    _
  $region27: #{mlp_pallas.1} parent=0 // pred_check_branch
    %243 = sbr.rel (0) target = $region29
  $region28: #{mlp_pallas.1} parent=0 // pred_region
    _
  $region29: #{mlp_pallas.1} parent=0 // pred_fallthru
    _

</llo_original>
